<compile_context>
chip_gen: v7x
topology: tpu7x:2x2x1
jax: 0.10.0
libtpu: 0.0.40
codegen_flags: <defaults>
</compile_context>

<pallas_src>
import math

import jax
import jax.numpy as jnp
from jax.experimental import pallas as pl
from jax.experimental.pallas import tpu as pltpu


def _copy_kernel(x_ref, o_ref):
    # Pure pass-through: copy the current lane-dense tile unchanged.
    o_ref[...] = x_ref[...]


_LANE = 128
_SUBLANE = 8
_MIN_TILE_ELEMS = _LANE * _SUBLANE            # 1024 elements = one (8,128) f32 tile
_TARGET_BLOCK_BYTES = 4 * 1024 * 1024         # ~4 MiB/block; x2 buffers x2 arrays ~= 16 MiB resident
_MIN_GRID_STEPS = 4                           # give v7x's 2 TCs >= 2 steps each on large inputs


def layer1_identity(x: jax.Array, *, donate: bool = False) -> jax.Array:
    """Optimized pass-through Pallas copy kernel (demo only).

    NOTE: this is a full HBM round trip; the production-fast path for a no-op
    layer is simply to return `x` (a wrapper reshape is metadata-only).
    If `donate=True`, the input buffer is aliased onto the output and must not
    be reused by the caller afterwards.
    """
    orig_shape = x.shape
    total = math.prod(orig_shape) if orig_shape else 1

    flat = x.reshape(total)

    # Pad odd sizes up to a multiple of 1024 so the layout is full (8,128)
    # tiles with unmasked stores (instead of a single-sublane masked layout).
    pad = (-total) % _MIN_TILE_ELEMS
    if pad:
        flat = jnp.concatenate([flat, jnp.zeros((pad,), dtype=x.dtype)])
    padded_total = total + pad

    # Lane width: widest multiple of 128 (<= 2048) dividing padded_total while
    # keeping rows a multiple of 8.  cols=128 always succeeds after padding.
    cols = _LANE
    for c in (2048, 1024, 512, 256, 128):
        if padded_total % c == 0 and (padded_total // c) % _SUBLANE == 0:
            cols = c
            break
    rows = padded_total // cols
    x2 = flat.reshape(rows, cols)

    # Block rows: as large as the VMEM budget allows (~4 MiB/block), but capped
    # so large inputs still produce >= _MIN_GRID_STEPS grid steps for megacore.
    bytes_per_row = cols * x.dtype.itemsize
    vmem_rows = max(_SUBLANE,
                    (_TARGET_BLOCK_BYTES // bytes_per_row) // _SUBLANE * _SUBLANE)
    tile_rows = min(rows, vmem_rows)
    if rows >= _MIN_GRID_STEPS * _SUBLANE:
        per_step = pl.cdiv(rows, _MIN_GRID_STEPS)
        per_step = max(_SUBLANE, pl.cdiv(per_step, _SUBLANE) * _SUBLANE)
        tile_rows = min(tile_rows, per_step)
    grid = (pl.cdiv(rows, tile_rows),)

    extra = {}
    if donate:
        extra["input_output_aliases"] = {0: 0}

    y2 = pl.pallas_call(
        _copy_kernel,
        out_shape=jax.ShapeDtypeStruct((rows, cols), x.dtype),
        grid=grid,
        in_specs=[pl.BlockSpec((tile_rows, cols), lambda i: (i, 0))],
        out_specs=pl.BlockSpec((tile_rows, cols), lambda i: (i, 0)),
        compiler_params=pltpu.CompilerParams(
            # With >= 2 grid steps, v7x's two TensorCores each drive their own
            # copy DMA stream; harmless no-op on single-TC v5e/v6e.
            dimension_semantics=("parallel",),
        ),
        **extra,
    )(x2)

    y = y2.reshape(padded_total)
    if pad:
        y = y[:total]
    return y.reshape(orig_shape)


def layer1_forward(x: jax.Array):
    """Semantically equivalent to PyTorch Layer1.forward: does nothing, returns None.

    No kernel is launched: a no-op forward must not pay a full-tensor HBM
    round trip, and under jit a discarded pallas_call result would be DCE'd.
    """
    del x
    return None


if __name__ == "__main__":
    key = jax.random.PRNGKey(0)
    k0, k1 = jax.random.split(key)

    # Small NCHW input consistent with a conv-style layer: batch=2, channels=4,
    # spatial=16x16 (total = 2048 elements -> lane-dense (8, 256) layout).
    x = jax.random.normal(k0, (2, 4, 16, 16), dtype=jnp.float32)
    expected = jnp.array(x, copy=True)

    # Semantics check: the module's forward returns None and launches nothing.
    out = layer1_forward(x)
    assert out is None

    # Run the demo pass-through kernel once and block on its result.
    y = layer1_identity(x)  # donate=False: x stays valid
    jax.block_until_ready(y)
    assert y.shape == expected.shape and y.dtype == expected.dtype
    assert bool(jnp.all(y == expected))

    # Exercise the odd-size (padded) path: total = 2*4*9*5 = 360 -> pad to 1024.
    x_odd = jax.random.normal(k1, (2, 4, 9, 5), dtype=jnp.float32)
    y_odd = layer1_identity(x_odd)
    jax.block_until_ready(y_odd)
    assert y_odd.shape == x_odd.shape and bool(jnp.all(y_odd == x_odd))

    print("KERNEL_OK")
</pallas_src>

<mosaic_0001>
module attributes {stable_mosaic.version = 11 : i64} {
  func.func @_copy_kernel(%arg0: i32, %arg1: memref<8x256xf32, #tpu.memory_space<vmem>>, %arg2: memref<8x256xf32, #tpu.memory_space<vmem>>) attributes {dimension_semantics = [#tpu.dimension_semantics<parallel>], iteration_bounds = array<i64: 1>, scalar_prefetch = 0 : i64, scratch_operands = 0 : i64, tpu.core_type = #tpu.core_type<tc>, window_params = [{transform_indices = @transform_0, window_bounds = array<i64: 8, 256>}, {transform_indices = @transform_1, window_bounds = array<i64: 8, 256>}]} {
    %c0 = arith.constant 0 : index
    %c0_0 = arith.constant 0 : index
    %0 = vector.load %arg1[%c0, %c0_0] : memref<8x256xf32, #tpu.memory_space<vmem>>, vector<8x256xf32>
    %c0_1 = arith.constant 0 : index
    %c0_2 = arith.constant 0 : index
    %1 = vector.load %arg2[%c0_1, %c0_2] : memref<8x256xf32, #tpu.memory_space<vmem>>, vector<8x256xf32>
    tpu.vector_store %arg2[%c0_1, %c0_2], %0 {strides = array<i32>} : memref<8x256xf32, #tpu.memory_space<vmem>>, vector<8x256xf32>,
    return
  }
  func.func @transform_0(%arg0: i32) -> (i32, i32) {
    %c0_i32 = arith.constant 0 : i32
    %c0_i32_0 = arith.constant 0 : i32
    return %arg0, %c0_i32 : i32, i32
  }
  func.func @transform_1(%arg0: i32) -> (i32, i32) {
    %c0_i32 = arith.constant 0 : i32
    %c0_i32_0 = arith.constant 0 : i32
    return %arg0, %c0_i32 : i32, i32
  }
}

</mosaic_0001>

<llo_original>
// kernel: tpu_custom_call.1
$region0: #{tpu_custom_call.1}
  #allocation0 [shape = 'u32[]', space=smem, size = 0x4, offset = 0x4, fixed_abs, tag = 'smem constant byte address 0x4 - core index']
  #allocation1 [shape = 'u32[144,128]{1,0:T(1,128)}', space=vmem, size = 0x12000, scoped, tag = 'internal scratch']
  %s0 = inlined_call_operand.hbm [shape: f32[8,256], index: 0, kind: input, shape index: {}]
  %s1 = inlined_call_operand.hbm [shape: f32[8,256], index: 1, kind: output, shape index: {}]
  %s2 = sld [smem:[#allocation0]]
  $region18: #{tpu_custom_call.1} parent=0
    _
  %s4 = ssub.s32 1, %s2
  %s5 = scalar_select 0, %s4, %s2
  $region1: #{tpu_custom_call.1} parent=0
    #allocation2 [shape = 'u8[8192]{0}', space=vmem, size = 0x2000, scoped, tag = 'input window, operand 0, single buffered']
    #allocation3 [shape = 's32[1]{0}', space=sflag, size = 0x4, scoped, tag = 'scoped memory for tpu_custom_call.1']
    #allocation4 [shape = 's32[1]{0}', space=sflag, size = 0x4, scoped, tag = 'scoped memory for tpu_custom_call.1']
    #allocation5 [shape = 'u8[8192]{0}', space=vmem, size = 0x2000, scoped, tag = 'output window, operand 0, single buffered']
    %6 = vsyncpa [#allocation3], 0
    %7 = vsyncpa [#allocation4], 0
    // Predicated region
    $region2: #{tpu_custom_call.1} parent=1 // pred_check
      _
    $region3: #{tpu_custom_call.1} parent=1 // pred_check_branch
      %9 = sbr.rel (0) target = $region5
    $region4: #{tpu_custom_call.1} parent=1 // pred_region
      %s11 = ssub.s32 256, 256
      %12 = vsyncadd [#allocation3], %s11
      %s14 = sshll.u32 [#allocation2], 4
      %s15 = int_to_ptr.vmem [resolvable:$true] %s14
      %17 = dma.hbm_to_vmem [thread:$0]  %s0, 256, %s15, [#allocation3]
    $region5: #{tpu_custom_call.1} parent=1 // pred_fallthru
      _
    // Predicated region
    $region6: #{tpu_custom_call.1} parent=1 // pred_check
      _
    $region7: #{tpu_custom_call.1} parent=1 // pred_check_branch
      %19 = sbr.rel (0) target = $region9
    $region8: #{tpu_custom_call.1} parent=1 // pred_region
      %20 = dma.done [#allocation3], 256
    $region9: #{tpu_custom_call.1} parent=1 // pred_fallthru
      _
    %v21 = vld [vmem:[#allocation2] sm:$0xff]
    %v22 = vld [vmem:[#allocation2 + $0x8] sm:$0xff]
    %23 = vst [vmem:[#allocation5] sm:$0xff] %v21
    %24 = vst [vmem:[#allocation5 + $0x8] sm:$0xff] %v22
    // Predicated region
    $region10: #{tpu_custom_call.1} parent=1 // pred_check
      _
    $region11: #{tpu_custom_call.1} parent=1 // pred_check_branch
      %26 = sbr.rel (0) target = $region13
    $region12: #{tpu_custom_call.1} parent=1 // pred_region
      %s28 = ssub.s32 256, 256
      %29 = vsyncadd [#allocation4], %s28
      %s31 = sshll.u32 [#allocation5], 4
      %s32 = int_to_ptr.vmem [resolvable:$true] %s31
      %34 = dma.vmem_to_hbm [thread:$0]  %s32, 256, %s1, [#allocation4]
    $region13: #{tpu_custom_call.1} parent=1 // pred_fallthru
      _
    // Predicated region
    $region14: #{tpu_custom_call.1} parent=1 // pred_check
      _
    $region15: #{tpu_custom_call.1} parent=1 // pred_check_branch
      %36 = sbr.rel (0) target = $region17
    $region16: #{tpu_custom_call.1} parent=1 // pred_region
      %37 = dma.done [#allocation4], 256
    $region17: #{tpu_custom_call.1} parent=1 // pred_fallthru
      _
    %38 = vsyncpa [#allocation3], 1
    %39 = vsyncpa [#allocation4], 1

</llo_original>
